<compile_context>
chip_gen: v6e
topology: v6e:2x2x1
jax: 0.10.0
libtpu: 0.0.40
codegen_flags: <defaults>
</compile_context>

<pallas_src>
import math

import jax
import jax.numpy as jnp
from jax import lax
from jax.experimental import pallas as pl
from jax.experimental.pallas import tpu as pltpu

NUM_PLANE = 7
FEAT = 32
NUM_COEF = 8          # a, b, c, k0, k1, k2, pc0, pc1
MAX_TILE_M = 2048     # sweepable 1024..4096
TILE_ALIGN = 512


# --------------------------------------------------------------------------------------
# Pallas kernel: per-query hot path (d_n, d_roi, true distance, belongings softmax, UDF)
# --------------------------------------------------------------------------------------
def _soft_udf_kernel(coef_ref, pts_ref, sd_ref, pb_ref):
    # points tile: (3, T) -- x/y/z on sublanes (free slices), flat query index on lanes
    x = pts_ref[0:1, :]                          # (1, T)
    y = pts_ref[1:2, :]
    z = pts_ref[2:3, :]

    # per-plane constants as (P, 1) columns; each is used exactly once below so there
    # is exactly one lane-broadcast per constant (nothing to hoist / re-materialize).
    a = coef_ref[:, 0:1]                         # (P, 1)
    b = coef_ref[:, 1:2]
    c = coef_ref[:, 2:3]
    k0 = coef_ref[:, 3:4]
    k1 = coef_ref[:, 4:5]
    k2 = coef_ref[:, 5:6]
    pc0 = coef_ref[:, 6:7]
    pc1 = coef_ref[:, 7:8]

    # |points @ plane_m|
    d_n = jnp.abs(a * x + b * y + c * z)         # (P, T)

    # roi distance with the projection + FEAT contraction folded into k0, k1, k2
    d_roi = k0 * x + k1 * y + k2                 # (P, T)
    td = jnp.sqrt(d_n * d_n + d_roi * d_roi)     # (P, T)

    # belongings logits (rank-1 collapsed) + numerically stable softmax over planes
    logits = pc0 * x + pc1 * y                   # (P, T)
    m = jnp.max(logits, axis=0, keepdims=True)   # (1, T)  XLU cross-sublane reduce
    e = jnp.exp(logits - m)                      # EUP
    denom = jnp.sum(e, axis=0, keepdims=True)    # (1, T)
    pb = e / denom                               # exact division (fixes accuracy bug)

    # full-block, lane-dense stores (plane-major outputs)
    pb_ref[...] = pb
    sd_ref[...] = jnp.sum(pb * td, axis=0, keepdims=True)


def _pick_tile_m(m_total):
    """Largest aligned tile <= MAX_TILE_M that keeps the 1-D grid at >= 2 tiles."""
    if m_total <= TILE_ALIGN:
        return TILE_ALIGN
    half = -(-m_total // 2)                        # ceil(M / 2)
    tile = -(-half // TILE_ALIGN) * TILE_ALIGN     # round up to alignment
    return min(MAX_TILE_M, tile)


def _run_kernel(coef, points_flat):
    """coef: (P, NUM_COEF) f32; points_flat: (3, M) f32 with M = B*N."""
    p = coef.shape[0]
    m_total = points_flat.shape[1]
    tile_m = _pick_tile_m(m_total)
    num_tiles = pl.cdiv(m_total, tile_m)
    m_pad = num_tiles * tile_m
    if m_pad != m_total:                           # ragged tail: zero-pad (numerically safe)
        points_flat = jnp.pad(points_flat, ((0, 0), (0, m_pad - m_total)))

    out_shapes = (
        jax.ShapeDtypeStruct((1, m_pad), jnp.float32),   # soft_distance
        jax.ShapeDtypeStruct((p, m_pad), jnp.float32),   # predict_belongs (plane-major)
    )
    grid_spec = pltpu.PrefetchScalarGridSpec(
        num_scalar_prefetch=0,
        grid=(num_tiles,),
        in_specs=[
            # tiny constant coefficient table; block index never changes -> no re-DMA
            pl.BlockSpec((p, NUM_COEF), lambda i: (0, 0)),
            pl.BlockSpec((3, tile_m), lambda i: (0, i)),      # points (3, M)
        ],
        out_specs=[
            pl.BlockSpec((1, tile_m), lambda i: (0, i)),
            pl.BlockSpec((p, tile_m), lambda i: (0, i)),
        ],
    )
    sd, pb = pl.pallas_call(
        _soft_udf_kernel,
        out_shape=out_shapes,
        grid_spec=grid_spec,
        compiler_params=pltpu.CompilerParams(dimension_semantics=("parallel",)),
    )(coef, points_flat)
    return sd[:, :m_total], pb[:, :m_total]


# --------------------------------------------------------------------------------------
# Parameters (deterministic, mimicking torch.nn.Linear default init shapes)
# --------------------------------------------------------------------------------------
def init_params(key, num_plane=NUM_PLANE):
    ks = jax.random.split(key, 11)

    def linear(kw, kb, in_f, out_f):
        bound = 1.0 / math.sqrt(in_f)
        w = jax.random.uniform(kw, (out_f, in_f), jnp.float32, -bound, bound)
        b = jax.random.uniform(kb, (out_f,), jnp.float32, -bound, bound)
        return w, b

    params = {"z_vector": jax.random.uniform(ks[0], (1, 256), jnp.float32)}
    params["fe1_w"], params["fe1_b"] = linear(ks[1], ks[2], 256, num_plane * 32)
    params["fe2_w"], params["fe2_b"] = linear(ks[3], ks[4], num_plane * 32, num_plane * 32)
    params["bel_w"], params["bel_b"] = linear(ks[5], ks[6], 32, 96)   # to_belongings_soft
    params["par_w"], params["par_b"] = linear(ks[7], ks[8], 32, 2)    # to_parameters
    params["roi_w"], params["roi_b"] = linear(ks[9], ks[10], 32, 96)  # to_interest_region
    return params


# --------------------------------------------------------------------------------------
# Forward pass (matches Base_model2.forward outputs and layouts)
# --------------------------------------------------------------------------------------
def base_model2_forward(params, v_data, num_plane=NUM_PLANE):
    points, _sdfs = v_data                                   # sdfs unused by forward
    batch, nq, _ = points.shape

    # parameter-side feature extractor (tiny, plain JAX glue)
    h = jnp.maximum(params["z_vector"] @ params["fe1_w"].T + params["fe1_b"], 0.0)
    h = jnp.maximum(h @ params["fe2_w"].T + params["fe2_b"], 0.0)
    plane_features = h.reshape(1, num_plane, FEAT)

    plane_m_polar = plane_features @ params["par_w"].T + params["par_b"]    # (1, P, 2)
    rho = plane_m_polar[:, :, 0] * 2.0 * jnp.pi
    a = jnp.cos(rho)
    b = jnp.sin(rho)
    c = -plane_m_polar[:, :, 1]
    plane_m = jnp.stack((a, b, c), axis=1)                                  # (1, 3, P)

    roi = (plane_features @ params["roi_w"].T + params["roi_b"]).reshape(1, num_plane, 3, FEAT)
    pbf = (plane_features @ params["bel_w"].T + params["bel_b"]).reshape(1, num_plane, 3, FEAT)

    # rank-1 collapse of the FEAT contractions -> 2 scalars per plane per field
    roi0, pbf0 = roi[0], pbf[0]                                             # (P, 3, 32)
    rc0 = jnp.sum(roi0[:, 0, :] * roi0[:, 2, :], axis=-1)                   # (P,)
    rc1 = jnp.sum(roi0[:, 1, :] * roi0[:, 2, :], axis=-1)
    pc0 = jnp.sum(pbf0[:, 0, :] * pbf0[:, 2, :], axis=-1)
    pc1 = jnp.sum(pbf0[:, 1, :] * pbf0[:, 2, :], axis=-1)

    # fold the projection into the roi distance:  d_roi = k0*x + k1*y + k2
    a1, b1, c1 = a[0], b[0], c[0]                                           # (P,)
    k0 = b1 * b1 * rc0 - a1 * b1 * rc1
    k1 = a1 * a1 * rc1 - a1 * b1 * rc0
    k2 = -(a1 * c1 * rc0 + b1 * c1 * rc1)
    coef = jnp.stack([a1, b1, c1, k0, k1, k2, pc0, pc1], axis=1)            # (P, 8)
    coef = coef.astype(jnp.float32)

    # flatten B into the tiled/lane axis: (B, N, 3) -> (3, B*N)
    points_flat = jnp.transpose(points, (2, 0, 1)).reshape(3, batch * nq)

    sd_f, pb_f = _run_kernel(coef, points_flat)

    soft_distance = sd_f.reshape(batch, nq)                                       # (B, N)
    predict_belongs = jnp.transpose(pb_f.reshape(num_plane, batch, nq), (1, 2, 0))  # (B, N, P)

    # projection / d_roi: cheap elementwise functions of (x, y) - recompute directly in
    # their PyTorch output layouts instead of storing plane-major + transposing.
    a_e = plane_m[:, 0, :, None]                                            # (1, P, 1)
    b_e = plane_m[:, 1, :, None]
    c_e = plane_m[:, 2, :, None]
    xb = points[:, None, :, 0]                                              # (B, 1, N)
    yb = points[:, None, :, 1]
    x_proj = b_e * (b_e * xb - a_e * yb) - a_e * c_e                        # (B, P, N)
    y_proj = a_e * (-b_e * xb + a_e * yb) - b_e * c_e
    projection = jnp.stack((x_proj, y_proj), axis=-1)                       # (B, P, N, 2)

    d_roi = (points[:, :, 0:1] * k0[None, None, :]
             + points[:, :, 1:2] * k1[None, None, :]
             + k2[None, None, :])                                           # (B, N, P)

    return soft_distance, predict_belongs, plane_m, projection, d_roi


# --------------------------------------------------------------------------------------
# Pure-JAX reference (mirrors the PyTorch ops, full FEAT contractions) for checking
# --------------------------------------------------------------------------------------
def reference_forward(plane_m, roi, pbf, points):
    hp = lax.Precision.HIGHEST
    d_n = jnp.abs(jnp.matmul(points, plane_m, precision=hp))               # (B, N, P)
    a_e = plane_m[:, 0, :, None]
    b_e = plane_m[:, 1, :, None]
    c_e = plane_m[:, 2, :, None]
    x = points[:, None, :, 0]
    y = points[:, None, :, 1]
    x_proj = b_e * (b_e * x - a_e * y) - a_e * c_e
    y_proj = a_e * (-b_e * x + a_e * y) - b_e * c_e
    projection = jnp.stack((x_proj, y_proj), axis=-1)                      # (B, P, N, 2)
    d_roi = jnp.matmul(jnp.matmul(projection, roi[:, :, 0:2], precision=hp),
                       jnp.swapaxes(roi[:, :, 2:3], -1, -2), precision=hp)
    d_roi = jnp.transpose(d_roi, (0, 2, 1, 3))[:, :, :, 0]                 # (B, N, P)
    true_distance = jnp.sqrt(d_n ** 2 + d_roi ** 2)
    logits = jnp.matmul(jnp.matmul(points[:, None, :, :2], pbf[:, :, 0:2], precision=hp),
                        jnp.swapaxes(pbf[:, :, 2:3], -1, -2), precision=hp)
    predict_belongs = jax.nn.softmax(jnp.transpose(logits, (0, 2, 1, 3))[:, :, :, 0], axis=-1)
    soft_distance = (predict_belongs * true_distance).sum(-1)
    return soft_distance, predict_belongs, projection, d_roi


if __name__ == "__main__":
    key = jax.random.PRNGKey(0)
    pkey, kp, ksdf = jax.random.split(key, 3)
    params = init_params(pkey)

    B, N = 2, 1024                                   # M = B*N = 2048 -> 2 tiles of 1024
    points = jax.random.uniform(kp, (B, N, 3), jnp.float32, minval=-1.0, maxval=1.0)
    sdfs = jax.random.uniform(ksdf, (B, N), jnp.float32)   # unused by forward, kept for parity

    outs = base_model2_forward(params, (points, sdfs))
    outs = jax.block_until_ready(outs)
    soft_distance, predict_belongs, plane_m, projection, d_roi = outs

    # sanity check against the pure-JAX reference of the PyTorch forward
    h = jnp.maximum(params["z_vector"] @ params["fe1_w"].T + params["fe1_b"], 0.0)
    h = jnp.maximum(h @ params["fe2_w"].T + params["fe2_b"], 0.0)
    pf = h.reshape(1, NUM_PLANE, FEAT)
    roi = (pf @ params["roi_w"].T + params["roi_b"]).reshape(1, NUM_PLANE, 3, FEAT)
    pbf = (pf @ params["bel_w"].T + params["bel_b"]).reshape(1, NUM_PLANE, 3, FEAT)
    r_sd, r_pb, r_proj, r_droi = reference_forward(plane_m, roi, pbf, points)

    assert soft_distance.shape == (B, N)
    assert predict_belongs.shape == (B, N, NUM_PLANE)
    assert plane_m.shape == (1, 3, NUM_PLANE)
    assert projection.shape == (B, NUM_PLANE, N, 2)
    assert d_roi.shape == (B, N, NUM_PLANE)
    assert bool(jnp.all(jnp.isfinite(soft_distance)))
    # exact softmax division + f32 math everywhere -> only reassociation-level diffs remain
    assert jnp.allclose(soft_distance, r_sd, atol=1e-4, rtol=1e-3)
    assert jnp.allclose(predict_belongs, r_pb, atol=1e-4, rtol=1e-3)
    assert jnp.allclose(projection, r_proj, atol=1e-4, rtol=1e-3)
    assert jnp.allclose(d_roi, r_droi, atol=1e-4, rtol=1e-3)

    print("KERNEL_OK")
</pallas_src>

<mosaic_0001>
module attributes {stable_mosaic.version = 11 : i64} {
  func.func @_soft_udf_kernel(%arg0: i32, %arg1: memref<7x8xf32, #tpu.memory_space<vmem>>, %arg2: memref<3x1024xf32, #tpu.memory_space<vmem>>, %arg3: memref<1x1024xf32, #tpu.memory_space<vmem>>, %arg4: memref<7x1024xf32, #tpu.memory_space<vmem>>) attributes {dimension_semantics = [#tpu.dimension_semantics<parallel>], iteration_bounds = array<i64: 2>, scalar_prefetch = 0 : i64, scratch_operands = 0 : i64, tpu.core_type = #tpu.core_type<tc>, window_params = [{pipeline_mode = #tpu.pipeline_mode<synchronous>, transform_indices = @transform_0, window_bounds = array<i64: 7, 8>}, {transform_indices = @transform_1, window_bounds = array<i64: 3, 1024>}, {transform_indices = @transform_2, window_bounds = array<i64: 1, 1024>}, {transform_indices = @transform_3, window_bounds = array<i64: 7, 1024>}]} {
    %c0 = arith.constant 0 : index
    %c0_0 = arith.constant 0 : index
    %0 = vector.load %arg2[%c0, %c0_0] : memref<3x1024xf32, #tpu.memory_space<vmem>>, vector<1x1024xf32>
    %c1 = arith.constant 1 : index
    %c0_1 = arith.constant 0 : index
    %1 = vector.load %arg2[%c1, %c0_1] : memref<3x1024xf32, #tpu.memory_space<vmem>>, vector<1x1024xf32>
    %c2 = arith.constant 2 : index
    %c0_2 = arith.constant 0 : index
    %2 = vector.load %arg2[%c2, %c0_2] : memref<3x1024xf32, #tpu.memory_space<vmem>>, vector<1x1024xf32>
    %c0_3 = arith.constant 0 : index
    %c0_4 = arith.constant 0 : index
    %3 = vector.load %arg1[%c0_3, %c0_4] : memref<7x8xf32, #tpu.memory_space<vmem>>, vector<7x1xf32>
    %c0_5 = arith.constant 0 : index
    %c1_6 = arith.constant 1 : index
    %4 = vector.load %arg1[%c0_5, %c1_6] : memref<7x8xf32, #tpu.memory_space<vmem>>, vector<7x1xf32>
    %c0_7 = arith.constant 0 : index
    %c2_8 = arith.constant 2 : index
    %5 = vector.load %arg1[%c0_7, %c2_8] : memref<7x8xf32, #tpu.memory_space<vmem>>, vector<7x1xf32>
    %c0_9 = arith.constant 0 : index
    %c3 = arith.constant 3 : index
    %6 = vector.load %arg1[%c0_9, %c3] : memref<7x8xf32, #tpu.memory_space<vmem>>, vector<7x1xf32>
    %c0_10 = arith.constant 0 : index
    %c4 = arith.constant 4 : index
    %7 = vector.load %arg1[%c0_10, %c4] : memref<7x8xf32, #tpu.memory_space<vmem>>, vector<7x1xf32>
    %c0_11 = arith.constant 0 : index
    %c5 = arith.constant 5 : index
    %8 = vector.load %arg1[%c0_11, %c5] : memref<7x8xf32, #tpu.memory_space<vmem>>, vector<7x1xf32>
    %c0_12 = arith.constant 0 : index
    %c6 = arith.constant 6 : index
    %9 = vector.load %arg1[%c0_12, %c6] : memref<7x8xf32, #tpu.memory_space<vmem>>, vector<7x1xf32>
    %c0_13 = arith.constant 0 : index
    %c7 = arith.constant 7 : index
    %10 = vector.load %arg1[%c0_13, %c7] : memref<7x8xf32, #tpu.memory_space<vmem>>, vector<7x1xf32>
    %11 = vector.broadcast %3 : vector<7x1xf32> to vector<7x1024xf32>
    %12 = vector.broadcast %0 : vector<1x1024xf32> to vector<7x1024xf32>
    %13 = arith.mulf %11, %12 : vector<7x1024xf32>
    %14 = vector.broadcast %4 : vector<7x1xf32> to vector<7x1024xf32>
    %15 = vector.broadcast %1 : vector<1x1024xf32> to vector<7x1024xf32>
    %16 = arith.mulf %14, %15 : vector<7x1024xf32>
    %17 = arith.addf %13, %16 : vector<7x1024xf32>
    %18 = vector.broadcast %5 : vector<7x1xf32> to vector<7x1024xf32>
    %19 = vector.broadcast %2 : vector<1x1024xf32> to vector<7x1024xf32>
    %20 = arith.mulf %18, %19 : vector<7x1024xf32>
    %21 = arith.addf %17, %20 : vector<7x1024xf32>
    %22 = math.absf %21 : vector<7x1024xf32>
    %23 = vector.broadcast %6 : vector<7x1xf32> to vector<7x1024xf32>
    %24 = vector.broadcast %0 : vector<1x1024xf32> to vector<7x1024xf32>
    %25 = arith.mulf %23, %24 : vector<7x1024xf32>
    %26 = vector.broadcast %7 : vector<7x1xf32> to vector<7x1024xf32>
    %27 = vector.broadcast %1 : vector<1x1024xf32> to vector<7x1024xf32>
    %28 = arith.mulf %26, %27 : vector<7x1024xf32>
    %29 = arith.addf %25, %28 : vector<7x1024xf32>
    %30 = vector.broadcast %8 : vector<7x1xf32> to vector<7x1024xf32>
    %31 = arith.addf %29, %30 : vector<7x1024xf32>
    %32 = arith.mulf %22, %22 : vector<7x1024xf32>
    %33 = arith.mulf %31, %31 : vector<7x1024xf32>
    %34 = arith.addf %32, %33 : vector<7x1024xf32>
    %35 = math.sqrt %34 : vector<7x1024xf32>
    %36 = vector.broadcast %9 : vector<7x1xf32> to vector<7x1024xf32>
    %37 = vector.broadcast %0 : vector<1x1024xf32> to vector<7x1024xf32>
    %38 = arith.mulf %36, %37 : vector<7x1024xf32>
    %39 = vector.broadcast %10 : vector<7x1xf32> to vector<7x1024xf32>
    %40 = vector.broadcast %1 : vector<1x1024xf32> to vector<7x1024xf32>
    %41 = arith.mulf %39, %40 : vector<7x1024xf32>
    %42 = arith.addf %38, %41 : vector<7x1024xf32>
    %cst = arith.constant dense<0xFF800000> : vector<1024xf32>
    %43 = vector.multi_reduction <maximumf>, %42, %cst [0] : vector<7x1024xf32> to vector<1024xf32>
    %44 = vector.shape_cast %43 : vector<1024xf32> to vector<1x1024xf32>
    %45 = vector.broadcast %44 : vector<1x1024xf32> to vector<7x1024xf32>
    %46 = arith.subf %42, %45 : vector<7x1024xf32>
    %47 = math.exp %46 : vector<7x1024xf32>
    %cst_14 = arith.constant dense<0.000000e+00> : vector<1024xf32>
    %48 = vector.multi_reduction <add>, %47, %cst_14 [0] : vector<7x1024xf32> to vector<1024xf32>
    %49 = vector.shape_cast %48 : vector<1024xf32> to vector<1x1024xf32>
    %50 = vector.broadcast %49 : vector<1x1024xf32> to vector<7x1024xf32>
    %51 = arith.divf %47, %50 : vector<7x1024xf32>
    %c0_15 = arith.constant 0 : index
    %c0_16 = arith.constant 0 : index
    %52 = vector.load %arg4[%c0_15, %c0_16] : memref<7x1024xf32, #tpu.memory_space<vmem>>, vector<7x1024xf32>
    tpu.vector_store %arg4[%c0_15, %c0_16], %51 {strides = array<i32>} : memref<7x1024xf32, #tpu.memory_space<vmem>>, vector<7x1024xf32>,
    %53 = arith.mulf %51, %35 : vector<7x1024xf32>
    %cst_17 = arith.constant dense<0.000000e+00> : vector<1024xf32>
    %54 = vector.multi_reduction <add>, %53, %cst_17 [0] : vector<7x1024xf32> to vector<1024xf32>
    %55 = vector.shape_cast %54 : vector<1024xf32> to vector<1x1024xf32>
    %c0_18 = arith.constant 0 : index
    %c0_19 = arith.constant 0 : index
    %56 = vector.load %arg3[%c0_18, %c0_19] : memref<1x1024xf32, #tpu.memory_space<vmem>>, vector<1x1024xf32>
    tpu.vector_store %arg3[%c0_18, %c0_19], %55 {strides = array<i32>} : memref<1x1024xf32, #tpu.memory_space<vmem>>, vector<1x1024xf32>,
    return
  }
  func.func @transform_0(%arg0: i32) -> (i32, i32) {
    %c0_i32 = arith.constant 0 : i32
    %c0_i32_0 = arith.constant 0 : i32
    %c0_i32_1 = arith.constant 0 : i32
    return %c0_i32, %c0_i32_0 : i32, i32
  }
  func.func @transform_1(%arg0: i32) -> (i32, i32) {
    %c0_i32 = arith.constant 0 : i32
    %c0_i32_0 = arith.constant 0 : i32
    return %c0_i32, %arg0 : i32, i32
  }
  func.func @transform_2(%arg0: i32) -> (i32, i32) {
    %c0_i32 = arith.constant 0 : i32
    %c0_i32_0 = arith.constant 0 : i32
    return %c0_i32, %arg0 : i32, i32
  }
  func.func @transform_3(%arg0: i32) -> (i32, i32) {
    %c0_i32 = arith.constant 0 : i32
    %c0_i32_0 = arith.constant 0 : i32
    return %c0_i32, %arg0 : i32, i32
  }
}

</mosaic_0001>

<llo_original>
// kernel: tpu_custom_call.1
$region0: #{tpu_custom_call.1}
  #allocation0 [shape = 'u32[]', space=smem, size = 0x4, offset = 0x4, fixed_abs, tag = 'smem constant byte address 0x4 - core index']
  #allocation1 [shape = 'u32[144,128]{1,0:T(1,128)}', space=vmem, size = 0x12000, scoped, tag = 'internal scratch']
  %s0 = inlined_call_operand.hbm [shape: f32[7,8], index: 0, kind: input, shape index: {}]
  %s1 = inlined_call_operand.hbm [shape: f32[3,2048], index: 1, kind: input, shape index: {}]
  %s2 = inlined_call_operand.hbm [shape: f32[1,2048], index: 2, kind: output, shape index: {0}]
  %s3 = inlined_call_operand.hbm [shape: f32[7,2048], index: 3, kind: output, shape index: {1}]
  %4 = xla_tuple %s2, %s3
  %s5 = sld [smem:[#allocation0]]
  $region57: #{tpu_custom_call.1} parent=0
    _
  %s7 = ssub.s32 1, %s5
  %s8 = scalar_select 0, %s7, %s5
  $region1: #{tpu_custom_call.1} parent=0
    #allocation2 [shape = 'u8[4096]{0}', space=vmem, size = 0x1000, scoped, tag = 'input window, operand 0, single buffered']
    #allocation3 [shape = 's32[2]{0}', space=sflag, size = 0x8, scoped, tag = 'scoped memory for tpu_custom_call.1']
    #allocation4 [shape = 's32[2]{0}', space=sflag, size = 0x8, scoped, tag = 'scoped memory for tpu_custom_call.1']
    #allocation5 [shape = 'u8[32768]{0}', space=vmem, size = 0x8000, scoped, tag = 'input window, operand 1']
    #allocation6 [shape = 's32[2]{0}', space=sflag, size = 0x8, scoped, tag = 'scoped memory for tpu_custom_call.1']
    #allocation7 [shape = 'u8[8192]{0}', space=vmem, size = 0x2000, scoped, tag = 'output window, operand 0']
    #allocation8 [shape = 'u8[65536]{0}', space=vmem, size = 0x10000, scoped, tag = 'output window, operand 1']
    #allocation9 [shape = 's32[2]{0}', space=sflag, size = 0x8, scoped, tag = 'scoped memory for tpu_custom_call.1']
    %9 = vsyncpa [#allocation3], 0
    %10 = vsyncpa [#allocation6], 0
    %s11 = scalar_lea.sflag [#allocation6], 1
    %12 = vsyncpa %s11, 0
    %13 = vsyncpa [#allocation4], 0
    %s14 = scalar_lea.sflag [#allocation4], 1
    %15 = vsyncpa %s14, 0
    %16 = vsyncpa [#allocation9], 0
    %s17 = scalar_lea.sflag [#allocation9], 1
    %18 = vsyncpa %s17, 0
    loop: start=0, step=1, limit=4
    $region2: #{tpu_custom_call.1} parent=1 // loop_pre_header
      _
    $region3: #{tpu_custom_call.1} parent=1 // loop_header
      %s20 = sphi 0, %s24
      %p21 = scmp.ge.s32.totalorder %s20, 4
      %s28 = sphi 0, %s28
      %s30 = sphi 0, %s28
      %s31 = sphi 0, %s30
      %s45 = sphi 0, %s31
      %s51 = sphi 0, %s53
      %s54 = sphi 0, %s51
      %s55 = sphi 0, %s54
      %s71 = sphi 0, %s55
      %s77 = sphi 0, %s79
      %s80 = sphi 0, %s77
      %s81 = sphi 0, %s80
      %s97 = sphi 0, %s81
      %s103 = sphi 0, %s105
      %s106 = sphi 0, %s103
      %s107 = sphi 0, %s106
      %s123 = sphi 0, %s107
    $region4: #{tpu_custom_call.1} parent=1 // loop_header_branch
      %23 = sbr.rel (%p21) target = $region8
    $region5: #{tpu_custom_call.1} parent=1 // loop_body
      %s25 = ssub.s32 %s20, 1
      %s26 = ssub.s32 %s20, 2
      %s27 = sadd.s32 %s20, 1
      %s29 = sadd.s32 %s28, 1
      %p32 = scmp.eq.s32.totalorder %s20, 1
      %p33 = scmp.ne.s32.totalorder %s28, %s30
      %p34 = scmp.eq.s32.totalorder %s20, 0
      %p35 = por %p33, %p34
      %p36 = scmp.ne.s32.totalorder %s28, %s30
      %p37 = scmp.eq.s32.totalorder %s25, 1
      %p38 = por %p36, %p37
      %p39 = scmp.ne.s32.totalorder %s30, %s31
      %p40 = scmp.eq.s32.totalorder %s25, 0
      %p41 = por %p39, %p40
      %p42 = scmp.ne.s32.totalorder %s30, %s31
      %p43 = scmp.eq.s32.totalorder %s26, 1
      %p44 = por %p42, %p43
      %p46 = scmp.ne.s32.totalorder %s31, %s45
      %p47 = scmp.eq.s32.totalorder %s26, 0
      %p48 = por %p46, %p47
      %s49 = ssub.s32 %s20, %s27
      %p50 = scmp.eq.s32.totalorder %s49, 0
      %s52 = sadd.s32 %s51, 1
      %s53 = scalar_select %p50, %s51, %s52
      %p56 = pneg %p50
      %p57 = scmp.eq.s32.totalorder %s20, 1
      %p58 = por %p56, %p57
      %p59 = scmp.ne.s32.totalorder %s51, %s54
      %p60 = scmp.eq.s32.totalorder %s20, 0
      %p61 = por %p59, %p60
      %p62 = scmp.ne.s32.totalorder %s51, %s54
      %p63 = scmp.eq.s32.totalorder %s25, 1
      %p64 = por %p62, %p63
      %p65 = scmp.ne.s32.totalorder %s54, %s55
      %p66 = scmp.eq.s32.totalorder %s25, 0
      %p67 = por %p65, %p66
      %p68 = scmp.ne.s32.totalorder %s54, %s55
      %p69 = scmp.eq.s32.totalorder %s26, 1
      %p70 = por %p68, %p69
      %p72 = scmp.ne.s32.totalorder %s55, %s71
      %p73 = scmp.eq.s32.totalorder %s26, 0
      %p74 = por %p72, %p73
      %s75 = ssub.s32 %s20, %s27
      %p76 = scmp.eq.s32.totalorder %s75, 0
      %s78 = sadd.s32 %s77, 1
      %s79 = scalar_select %p76, %s77, %s78
      %p82 = pneg %p76
      %p83 = scmp.eq.s32.totalorder %s20, 1
      %p84 = por %p82, %p83
      %p85 = scmp.ne.s32.totalorder %s77, %s80
      %p86 = scmp.eq.s32.totalorder %s20, 0
      %p87 = por %p85, %p86
      %p88 = scmp.ne.s32.totalorder %s77, %s80
      %p89 = scmp.eq.s32.totalorder %s25, 1
      %p90 = por %p88, %p89
      %p91 = scmp.ne.s32.totalorder %s80, %s81
      %p92 = scmp.eq.s32.totalorder %s25, 0
      %p93 = por %p91, %p92
      %p94 = scmp.ne.s32.totalorder %s80, %s81
      %p95 = scmp.eq.s32.totalorder %s26, 1
      %p96 = por %p94, %p95
      %p98 = scmp.ne.s32.totalorder %s81, %s97
      %p99 = scmp.eq.s32.totalorder %s26, 0
      %p100 = por %p98, %p99
      %s101 = ssub.s32 %s20, %s27
      %p102 = scmp.eq.s32.totalorder %s101, 0
      %s104 = sadd.s32 %s103, 1
      %s105 = scalar_select %p102, %s103, %s104
      %p108 = pneg %p102
      %p109 = scmp.eq.s32.totalorder %s20, 1
      %p110 = por %p108, %p109
      %p111 = scmp.ne.s32.totalorder %s103, %s106
      %p112 = scmp.eq.s32.totalorder %s20, 0
      %p113 = por %p111, %p112
      %p114 = scmp.ne.s32.totalorder %s103, %s106
      %p115 = scmp.eq.s32.totalorder %s25, 1
      %p116 = por %p114, %p115
      %p117 = scmp.ne.s32.totalorder %s106, %s107
      %p118 = scmp.eq.s32.totalorder %s25, 0
      %p119 = por %p117, %p118
      %p120 = scmp.ne.s32.totalorder %s106, %s107
      %p121 = scmp.eq.s32.totalorder %s26, 1
      %p122 = por %p120, %p121
      %p124 = scmp.ne.s32.totalorder %s107, %s123
      %p125 = scmp.eq.s32.totalorder %s26, 0
      %p126 = por %p124, %p125
      %p127 = scmp.le.s32.totalorder 1, %s20
      %p128 = scmp.lt.s32.totalorder %s20, 3
      %p129 = pnand %p127, %p128
      %p130 = pneg %p129
      // Predicated region
      $region9: #{tpu_custom_call.1} parent=5 // pred_check
        _
      $region10: #{tpu_custom_call.1} parent=5 // pred_check_branch
        %132 = sbr.rel (%p129) target = $region12
      $region11: #{tpu_custom_call.1} parent=5 // pred_region
        %s133 = ssub.s32 %s20, 1
        // Predicated region
        $region13: #{tpu_custom_call.1} parent=11 // pred_check
          %p134 = pneg %p41
        $region14: #{tpu_custom_call.1} parent=11 // pred_check_branch
          %136 = sbr.rel (%p134) target = $region16
        $region15: #{tpu_custom_call.1} parent=11 // pred_region
          %s138 = ssub.s32 128, 128
          %139 = vsyncadd [#allocation3], %s138
          %s141 = sshll.u32 [#allocation2], 4
          %s142 = int_to_ptr.vmem [resolvable:$true] %s141
          %144 = dma.hbm_to_vmem [thread:$0]  %s0, 128, %s142, [#allocation3]
        $region16: #{tpu_custom_call.1} parent=11 // pred_fallthru
          _
      $region12: #{tpu_custom_call.1} parent=5 // pred_fallthru
        _
      %p145 = scmp.lt.s32.totalorder %s20, 2
      // Predicated region
      $region17: #{tpu_custom_call.1} parent=5 // pred_check
        %p146 = pneg %p145
      $region18: #{tpu_custom_call.1} parent=5 // pred_check_branch
        %148 = sbr.rel (%p146) target = $region20
      $region19: #{tpu_custom_call.1} parent=5 // pred_region
        // Predicated region
        $region21: #{tpu_custom_call.1} parent=19 // pred_check
          %p149 = pneg %p61
        $region22: #{tpu_custom_call.1} parent=19 // pred_check_branch
          %151 = sbr.rel (%p149) target = $region24
        $region23: #{tpu_custom_call.1} parent=19 // pred_region
          %s152 = sand.u32 %s51, 1
          %s153 = scalar_lea.sflag [#allocation6], %s152
          %s154 = sand.u32 %s51, 1
          %s155 = smul.addr %s154, 32
          %s156 = scalar_lea.vmem [#allocation5], %s155
          %s157 = smul.u32 8, %s20
          %s159 = ssub.s32 512, 512
          %160 = vsyncadd %s153, %s159
          %s161 = smul.addr %s157, 64
          %s162 = scalar_lea.hbm %s1, %s161
          %s164 = sshll.u32 %s156, 4
          %s165 = int_to_ptr.vmem [resolvable:$true] %s164
          %167 = dma.hbm_to_vmem [thread:$0]  %s162, 512, %s165, %s153
        $region24: #{tpu_custom_call.1} parent=19 // pred_fallthru
          _
      $region20: #{tpu_custom_call.1} parent=5 // pred_fallthru
        _
      %p168 = scmp.le.s32.totalorder 1, %s20
      %p169 = scmp.lt.s32.totalorder %s20, 3
      %p170 = pnand %p168, %p169
      %p171 = pneg %p170
      // Predicated region
      $region25: #{tpu_custom_call.1} parent=5 // pred_check
        _
      $region26: #{tpu_custom_call.1} parent=5 // pred_check_branch
        %173 = sbr.rel (%p170) target = $region28
      $region27: #{tpu_custom_call.1} parent=5 // pred_region
        %s174 = ssub.s32 %s20, 1
        // Predicated region
        $region29: #{tpu_custom_call.1} parent=27 // pred_check
          %p175 = pneg %p41
        $region30: #{tpu_custom_call.1} parent=27 // pred_check_branch
          %177 = sbr.rel (%p175) target = $region32
        $region31: #{tpu_custom_call.1} parent=27 // pred_region
          %178 = dma.done [#allocation3], 128
        $region32: #{tpu_custom_call.1} parent=27 // pred_fallthru
          _
        %s179 = sand.u32 %s54, 1
        %s180 = scalar_lea.sflag [#allocation6], %s179
        %s181 = sand.u32 %s54, 1
        %s182 = smul.addr %s181, 32
        %s183 = scalar_lea.vmem [#allocation5], %s182
        // Predicated region
        $region33: #{tpu_custom_call.1} parent=27 // pred_check
          %p184 = pneg %p67
        $region34: #{tpu_custom_call.1} parent=27 // pred_check_branch
          %186 = sbr.rel (%p184) target = $region36
        $region35: #{tpu_custom_call.1} parent=27 // pred_region
          %187 = dma.done %s180, 512
        $region36: #{tpu_custom_call.1} parent=27 // pred_fallthru
          _
        %p188 = pneg %p41
        %p189 = pneg %p38
        %s190 = sand.u32 %s54, 1
        %s191 = scalar_lea.sflag [#allocation6], %s190
        %s192 = sand.u32 %s54, 1
        %s193 = smul.addr %s192, 32
        %s194 = scalar_lea.vmem [#allocation5], %s193
        %p195 = pneg %p67
        %p196 = pneg %p64
        %p197 = pneg %p93
        %p198 = pneg %p90
        %s199 = sand.u32 %s80, 1
        %s200 = scalar_lea.sflag [#allocation4], %s199
        %s201 = sand.u32 %s80, 1
        %s202 = smul.addr %s201, 8
        %s203 = scalar_lea.vmem [#allocation7], %s202
        %p204 = pneg %p119
        %p205 = pneg %p116
        %s206 = sand.u32 %s106, 1
        %s207 = scalar_lea.sflag [#allocation9], %s206
        %s208 = sand.u32 %s106, 1
        %s209 = smul.addr %s208, 64
        %s210 = scalar_lea.vmem [#allocation8], %s209
        %s211 = smul.u32 8, %s25
        %s212 = smul.u32 8, %s25
        %s213 = smul.u32 8, %s25
        %v214 = vld [vmem:[%s183] ss:$4 sm:$0xff]
        %s215 = scalar_lea.vmem %s183, 1 [#allocation5]
        %v216 = vld [vmem:[%s215] ss:$4 sm:$0xff]
        %s217 = scalar_lea.vmem %s183, 2 [#allocation5]
        %v218 = vld [vmem:[%s217] ss:$4 sm:$0xff]
        %v219 = vld [vmem:[#allocation2] sm:$0x7f]
        %221 = vset.pattern.permute.xlu0 0
        %222 = vperm.xlu0 %221, %v219
        %v223 = vpop.permute.xlu0 %222
        %v226 = vlaneseq
        %v227 = vshrl.u32 %v226, 7
        %v228 = vsub.s32 0, %v227
        %v229 = vrot.slane %v214, %v228
        %v230 = vlaneseq
        %v231 = vshrl.u32 %v230, 7
        %v232 = vsub.s32 1, %v231
        %v233 = vrot.slane %v214, %v232
        %v234 = vlaneseq
        %v235 = vshrl.u32 %v234, 7
        %v236 = vsub.s32 2, %v235
        %v237 = vrot.slane %v214, %v236
        %v238 = vlaneseq
        %v239 = vshrl.u32 %v238, 7
        %v240 = vsub.s32 3, %v239
        %v241 = vrot.slane %v214, %v240
        %v242 = vlaneseq
        %v243 = vshrl.u32 %v242, 7
        %v244 = vsub.s32 4, %v243
        %v245 = vrot.slane %v214, %v244
        %v246 = vlaneseq
        %v247 = vshrl.u32 %v246, 7
        %v248 = vsub.s32 5, %v247
        %v249 = vrot.slane %v214, %v248
        %v250 = vlaneseq
        %v251 = vshrl.u32 %v250, 7
        %v252 = vsub.s32 6, %v251
        %v253 = vrot.slane %v214, %v252
        %v254 = vlaneseq
        %v255 = vshrl.u32 %v254, 7
        %v256 = vsub.s32 7, %v255
        %v257 = vrot.slane %v214, %v256
        %v266 = vmul.f32 %v223, %v229
        %v267 = vmul.f32 %v223, %v233
        %v268 = vmul.f32 %v223, %v237
        %v269 = vmul.f32 %v223, %v241
        %v270 = vmul.f32 %v223, %v245
        %v271 = vmul.f32 %v223, %v249
        %v272 = vmul.f32 %v223, %v253
        %v273 = vmul.f32 %v223, %v257
        %274 = vset.pattern.permute.xlu0 1
        %275 = vperm.xlu0 %274, %v219
        %v276 = vpop.permute.xlu0 %275
        %v279 = vlaneseq
        %v280 = vshrl.u32 %v279, 7
        %v281 = vsub.s32 0, %v280
        %v282 = vrot.slane %v216, %v281
        %v283 = vlaneseq
        %v284 = vshrl.u32 %v283, 7
        %v285 = vsub.s32 1, %v284
        %v286 = vrot.slane %v216, %v285
        %v287 = vlaneseq
        %v288 = vshrl.u32 %v287, 7
        %v289 = vsub.s32 2, %v288
        %v290 = vrot.slane %v216, %v289
        %v291 = vlaneseq
        %v292 = vshrl.u32 %v291, 7
        %v293 = vsub.s32 3, %v292
        %v294 = vrot.slane %v216, %v293
        %v295 = vlaneseq
        %v296 = vshrl.u32 %v295, 7
        %v297 = vsub.s32 4, %v296
        %v298 = vrot.slane %v216, %v297
        %v299 = vlaneseq
        %v300 = vshrl.u32 %v299, 7
        %v301 = vsub.s32 5, %v300
        %v302 = vrot.slane %v216, %v301
        %v303 = vlaneseq
        %v304 = vshrl.u32 %v303, 7
        %v305 = vsub.s32 6, %v304
        %v306 = vrot.slane %v216, %v305
        %v307 = vlaneseq
        %v308 = vshrl.u32 %v307, 7
        %v309 = vsub.s32 7, %v308
        %v310 = vrot.slane %v216, %v309
        %v319 = vmul.f32 %v276, %v282
        %v320 = vmul.f32 %v276, %v286
        %v321 = vmul.f32 %v276, %v290
        %v322 = vmul.f32 %v276, %v294
        %v323 = vmul.f32 %v276, %v298
        %v324 = vmul.f32 %v276, %v302
        %v325 = vmul.f32 %v276, %v306
        %v326 = vmul.f32 %v276, %v310
        %v327 = vadd.f32 %v266, %v319
        %v328 = vadd.f32 %v267, %v320
        %v329 = vadd.f32 %v268, %v321
        %v330 = vadd.f32 %v269, %v322
        %v331 = vadd.f32 %v270, %v323
        %v332 = vadd.f32 %v271, %v324
        %v333 = vadd.f32 %v272, %v325
        %v334 = vadd.f32 %v273, %v326
        %335 = vset.pattern.permute.xlu0 2
        %336 = vperm.xlu0 %335, %v219
        %v337 = vpop.permute.xlu0 %336
        %v340 = vlaneseq
        %v341 = vshrl.u32 %v340, 7
        %v342 = vsub.s32 0, %v341
        %v343 = vrot.slane %v218, %v342
        %v344 = vlaneseq
        %v345 = vshrl.u32 %v344, 7
        %v346 = vsub.s32 1, %v345
        %v347 = vrot.slane %v218, %v346
        %v348 = vlaneseq
        %v349 = vshrl.u32 %v348, 7
        %v350 = vsub.s32 2, %v349
        %v351 = vrot.slane %v218, %v350
        %v352 = vlaneseq
        %v353 = vshrl.u32 %v352, 7
        %v354 = vsub.s32 3, %v353
        %v355 = vrot.slane %v218, %v354
        %v356 = vlaneseq
        %v357 = vshrl.u32 %v356, 7
        %v358 = vsub.s32 4, %v357
        %v359 = vrot.slane %v218, %v358
        %v360 = vlaneseq
        %v361 = vshrl.u32 %v360, 7
        %v362 = vsub.s32 5, %v361
        %v363 = vrot.slane %v218, %v362
        %v364 = vlaneseq
        %v365 = vshrl.u32 %v364, 7
        %v366 = vsub.s32 6, %v365
        %v367 = vrot.slane %v218, %v366
        %v368 = vlaneseq
        %v369 = vshrl.u32 %v368, 7
        %v370 = vsub.s32 7, %v369
        %v371 = vrot.slane %v218, %v370
        %v380 = vmul.f32 %v337, %v343
        %v381 = vmul.f32 %v337, %v347
        %v382 = vmul.f32 %v337, %v351
        %v383 = vmul.f32 %v337, %v355
        %v384 = vmul.f32 %v337, %v359
        %v385 = vmul.f32 %v337, %v363
        %v386 = vmul.f32 %v337, %v367
        %v387 = vmul.f32 %v337, %v371
        %v388 = vadd.f32 %v327, %v380
        %v389 = vadd.f32 %v328, %v381
        %v390 = vadd.f32 %v329, %v382
        %v391 = vadd.f32 %v330, %v383
        %v392 = vadd.f32 %v331, %v384
        %v393 = vadd.f32 %v332, %v385
        %v394 = vadd.f32 %v333, %v386
        %v395 = vadd.f32 %v334, %v387
        %v396 = vand.u32 2147483647, %v388
        %v397 = vand.u32 2147483647, %v389
        %v398 = vand.u32 2147483647, %v390
        %v399 = vand.u32 2147483647, %v391
        %v400 = vand.u32 2147483647, %v392
        %v401 = vand.u32 2147483647, %v393
        %v402 = vand.u32 2147483647, %v394
        %v403 = vand.u32 2147483647, %v395
        %404 = vset.pattern.permute.xlu0 3
        %405 = vperm.xlu0 %404, %v219
        %v406 = vpop.permute.xlu0 %405
        %v408 = vmul.f32 %v406, %v229
        %v409 = vmul.f32 %v406, %v233
        %v410 = vmul.f32 %v406, %v237
        %v411 = vmul.f32 %v406, %v241
        %v412 = vmul.f32 %v406, %v245
        %v413 = vmul.f32 %v406, %v249
        %v414 = vmul.f32 %v406, %v253
        %v415 = vmul.f32 %v406, %v257
        %416 = vset.pattern.permute.xlu0 4
        %417 = vperm.xlu0 %416, %v219
        %v418 = vpop.permute.xlu0 %417
        %v420 = vmul.f32 %v418, %v282
        %v421 = vmul.f32 %v418, %v286
        %v422 = vmul.f32 %v418, %v290
        %v423 = vmul.f32 %v418, %v294
        %v424 = vmul.f32 %v418, %v298
        %v425 = vmul.f32 %v418, %v302
        %v426 = vmul.f32 %v418, %v306
        %v427 = vmul.f32 %v418, %v310
        %v428 = vadd.f32 %v408, %v420
        %v429 = vadd.f32 %v409, %v421
        %v430 = vadd.f32 %v410, %v422
        %v431 = vadd.f32 %v411, %v423
        %v432 = vadd.f32 %v412, %v424
        %v433 = vadd.f32 %v413, %v425
        %v434 = vadd.f32 %v414, %v426
        %v435 = vadd.f32 %v415, %v427
        %436 = vset.pattern.permute.xlu0 5
        %437 = vperm.xlu0 %436, %v219
        %v438 = vpop.permute.xlu0 %437
        %v440 = vadd.f32 %v428, %v438
        %v441 = vadd.f32 %v429, %v438
        %v442 = vadd.f32 %v430, %v438
        %v443 = vadd.f32 %v431, %v438
        %v444 = vadd.f32 %v432, %v438
        %v445 = vadd.f32 %v433, %v438
        %v446 = vadd.f32 %v434, %v438
        %v447 = vadd.f32 %v435, %v438
        %v448 = vmul.f32 %v396, %v396
        %v449 = vmul.f32 %v397, %v397
        %v450 = vmul.f32 %v398, %v398
        %v451 = vmul.f32 %v399, %v399
        %v452 = vmul.f32 %v400, %v400
        %v453 = vmul.f32 %v401, %v401
        %v454 = vmul.f32 %v402, %v402
        %v455 = vmul.f32 %v403, %v403
        %v456 = vmul.f32 %v440, %v440
        %v457 = vmul.f32 %v441, %v441
        %v458 = vmul.f32 %v442, %v442
        %v459 = vmul.f32 %v443, %v443
        %v460 = vmul.f32 %v444, %v444
        %v461 = vmul.f32 %v445, %v445
        %v462 = vmul.f32 %v446, %v446
        %v463 = vmul.f32 %v447, %v447
        %v464 = vadd.f32 %v448, %v456
        %v465 = vadd.f32 %v449, %v457
        %v466 = vadd.f32 %v450, %v458
        %v467 = vadd.f32 %v451, %v459
        %v468 = vadd.f32 %v452, %v460
        %v469 = vadd.f32 %v453, %v461
        %v470 = vadd.f32 %v454, %v462
        %v471 = vadd.f32 %v455, %v463
        %v472 = vrsqrt.pop %v464
        %v473 = vmul.f32 %v464, %v472
        %vm474 = vcmp.eq.f32.partialorder %v464, inf
        %v475 = vsel %vm474, %v464, %v473
        %vm476 = vcmp.eq.f32.partialorder %v464, 0.0
        %v477 = vand.u32 %v464, 2147483648
        %v478 = vsel %vm476, %v477, %v475
        %v479 = vrsqrt.pop %v465
        %v480 = vmul.f32 %v465, %v479
        %vm481 = vcmp.eq.f32.partialorder %v465, inf
        %v482 = vsel %vm481, %v465, %v480
        %vm483 = vcmp.eq.f32.partialorder %v465, 0.0
        %v484 = vand.u32 %v465, 2147483648
        %v485 = vsel %vm483, %v484, %v482
        %v486 = vrsqrt.pop %v466
        %v487 = vmul.f32 %v466, %v486
        %vm488 = vcmp.eq.f32.partialorder %v466, inf
        %v489 = vsel %vm488, %v466, %v487
        %vm490 = vcmp.eq.f32.partialorder %v466, 0.0
        %v491 = vand.u32 %v466, 2147483648
        %v492 = vsel %vm490, %v491, %v489
        %v493 = vrsqrt.pop %v467
        %v494 = vmul.f32 %v467, %v493
        %vm495 = vcmp.eq.f32.partialorder %v467, inf
        %v496 = vsel %vm495, %v467, %v494
        %vm497 = vcmp.eq.f32.partialorder %v467, 0.0
        %v498 = vand.u32 %v467, 2147483648
        %v499 = vsel %vm497, %v498, %v496
        %v500 = vrsqrt.pop %v468
        %v501 = vmul.f32 %v468, %v500
        %vm502 = vcmp.eq.f32.partialorder %v468, inf
        %v503 = vsel %vm502, %v468, %v501
        %vm504 = vcmp.eq.f32.partialorder %v468, 0.0
        %v505 = vand.u32 %v468, 2147483648
        %v506 = vsel %vm504, %v505, %v503
        %v507 = vrsqrt.pop %v469
        %v508 = vmul.f32 %v469, %v507
        %vm509 = vcmp.eq.f32.partialorder %v469, inf
        %v510 = vsel %vm509, %v469, %v508
        %vm511 = vcmp.eq.f32.partialorder %v469, 0.0
        %v512 = vand.u32 %v469, 2147483648
        %v513 = vsel %vm511, %v512, %v510
        %v514 = vrsqrt.pop %v470
        %v515 = vmul.f32 %v470, %v514
        %vm516 = vcmp.eq.f32.partialorder %v470, inf
        %v517 = vsel %vm516, %v470, %v515
        %vm518 = vcmp.eq.f32.partialorder %v470, 0.0
        %v519 = vand.u32 %v470, 2147483648
        %v520 = vsel %vm518, %v519, %v517
        %v521 = vrsqrt.pop %v471
        %v522 = vmul.f32 %v471, %v521
        %vm523 = vcmp.eq.f32.partialorder %v471, inf
        %v524 = vsel %vm523, %v471, %v522
        %vm525 = vcmp.eq.f32.partialorder %v471, 0.0
        %v526 = vand.u32 %v471, 2147483648
        %v527 = vsel %vm525, %v526, %v524
        %528 = vset.pattern.permute.xlu0 6
        %529 = vperm.xlu0 %528, %v219
        %v530 = vpop.permute.xlu0 %529
        %v532 = vmul.f32 %v530, %v229
        %v533 = vmul.f32 %v530, %v233
        %v534 = vmul.f32 %v530, %v237
        %v535 = vmul.f32 %v530, %v241
        %v536 = vmul.f32 %v530, %v245
        %v537 = vmul.f32 %v530, %v249
        %v538 = vmul.f32 %v530, %v253
        %v539 = vmul.f32 %v530, %v257
        %540 = vset.pattern.permute.xlu0 7
        %541 = vperm.xlu0 %540, %v219
        %v542 = vpop.permute.xlu0 %541
        %v544 = vmul.f32 %v542, %v282
        %v545 = vmul.f32 %v542, %v286
        %v546 = vmul.f32 %v542, %v290
        %v547 = vmul.f32 %v542, %v294
        %v548 = vmul.f32 %v542, %v298
        %v549 = vmul.f32 %v542, %v302
        %v550 = vmul.f32 %v542, %v306
        %v551 = vmul.f32 %v542, %v310
        %v552 = vadd.f32 %v532, %v544
        %v553 = vadd.f32 %v533, %v545
        %v554 = vadd.f32 %v534, %v546
        %v555 = vadd.f32 %v535, %v547
        %v556 = vadd.f32 %v536, %v548
        %v557 = vadd.f32 %v537, %v549
        %v558 = vadd.f32 %v538, %v550
        %v559 = vadd.f32 %v539, %v551
        %vm560 = vcmask 1046528
        %v561 = vsel %vm560, %v552, -inf
        %v562 = vrot.slane %v561, 4
        %v563 = vmax.f32 %v561, %v562
        %v564 = vrot.slane %v563, 2
        %v565 = vmax.f32 %v563, %v564
        %v566 = vrot.slane %v565, 1
        %v567 = vmax.f32 %v565, %v566
        %v568 = vsel %vm560, %v553, -inf
        %v569 = vrot.slane %v568, 4
        %v570 = vmax.f32 %v568, %v569
        %v571 = vrot.slane %v570, 2
        %v572 = vmax.f32 %v570, %v571
        %v573 = vrot.slane %v572, 1
        %v574 = vmax.f32 %v572, %v573
        %v575 = vsel %vm560, %v554, -inf
        %v576 = vrot.slane %v575, 4
        %v577 = vmax.f32 %v575, %v576
        %v578 = vrot.slane %v577, 2
        %v579 = vmax.f32 %v577, %v578
        %v580 = vrot.slane %v579, 1
        %v581 = vmax.f32 %v579, %v580
        %v582 = vsel %vm560, %v555, -inf
        %v583 = vrot.slane %v582, 4
        %v584 = vmax.f32 %v582, %v583
        %v585 = vrot.slane %v584, 2
        %v586 = vmax.f32 %v584, %v585
        %v587 = vrot.slane %v586, 1
        %v588 = vmax.f32 %v586, %v587
        %v589 = vsel %vm560, %v556, -inf
        %v590 = vrot.slane %v589, 4
        %v591 = vmax.f32 %v589, %v590
        %v592 = vrot.slane %v591, 2
        %v593 = vmax.f32 %v591, %v592
        %v594 = vrot.slane %v593, 1
        %v595 = vmax.f32 %v593, %v594
        %v596 = vsel %vm560, %v557, -inf
        %v597 = vrot.slane %v596, 4
        %v598 = vmax.f32 %v596, %v597
        %v599 = vrot.slane %v598, 2
        %v600 = vmax.f32 %v598, %v599
        %v601 = vrot.slane %v600, 1
        %v602 = vmax.f32 %v600, %v601
        %v603 = vsel %vm560, %v558, -inf
        %v604 = vrot.slane %v603, 4
        %v605 = vmax.f32 %v603, %v604
        %v606 = vrot.slane %v605, 2
        %v607 = vmax.f32 %v605, %v606
        %v608 = vrot.slane %v607, 1
        %v609 = vmax.f32 %v607, %v608
        %v610 = vsel %vm560, %v559, -inf
        %v611 = vrot.slane %v610, 4
        %v612 = vmax.f32 %v610, %v611
        %v613 = vrot.slane %v612, 2
        %v614 = vmax.f32 %v612, %v613
        %v615 = vrot.slane %v614, 1
        %v616 = vmax.f32 %v614, %v615
        %v617 = vsub.f32 %v552, %v567
        %v618 = vsub.f32 %v553, %v574
        %v619 = vsub.f32 %v554, %v581
        %v620 = vsub.f32 %v555, %v588
        %v621 = vsub.f32 %v556, %v595
        %v622 = vsub.f32 %v557, %v602
        %v623 = vsub.f32 %v558, %v609
        %v624 = vsub.f32 %v559, %v616
        %v625 = vmul.f32 %v617, 1.442695
        %v626 = vpow.pop %v625
        %v627 = vmul.f32 %v618, 1.442695
        %v628 = vpow.pop %v627
        %v629 = vmul.f32 %v619, 1.442695
        %v630 = vpow.pop %v629
        %v631 = vmul.f32 %v620, 1.442695
        %v632 = vpow.pop %v631
        %v633 = vmul.f32 %v621, 1.442695
        %v634 = vpow.pop %v633
        %v635 = vmul.f32 %v622, 1.442695
        %v636 = vpow.pop %v635
        %v637 = vmul.f32 %v623, 1.442695
        %v638 = vpow.pop %v637
        %v639 = vmul.f32 %v624, 1.442695
        %v640 = vpow.pop %v639
        %v641 = vsel %vm560, %v626, 0.0
        %v642 = vrot.slane %v641, 4
        %v643 = vadd.f32 %v641, %v642
        %v644 = vrot.slane %v643, 2
        %v645 = vadd.f32 %v643, %v644
        %v646 = vrot.slane %v645, 1
        %v647 = vadd.f32 %v645, %v646
        %v648 = vsel %vm560, %v628, 0.0
        %v649 = vrot.slane %v648, 4
        %v650 = vadd.f32 %v648, %v649
        %v651 = vrot.slane %v650, 2
        %v652 = vadd.f32 %v650, %v651
        %v653 = vrot.slane %v652, 1
        %v654 = vadd.f32 %v652, %v653
        %v655 = vsel %vm560, %v630, 0.0
        %v656 = vrot.slane %v655, 4
        %v657 = vadd.f32 %v655, %v656
        %v658 = vrot.slane %v657, 2
        %v659 = vadd.f32 %v657, %v658
        %v660 = vrot.slane %v659, 1
        %v661 = vadd.f32 %v659, %v660
        %v662 = vsel %vm560, %v632, 0.0
        %v663 = vrot.slane %v662, 4
        %v664 = vadd.f32 %v662, %v663
        %v665 = vrot.slane %v664, 2
        %v666 = vadd.f32 %v664, %v665
        %v667 = vrot.slane %v666, 1
        %v668 = vadd.f32 %v666, %v667
        %v669 = vsel %vm560, %v634, 0.0
        %v670 = vrot.slane %v669, 4
        %v671 = vadd.f32 %v669, %v670
        %v672 = vrot.slane %v671, 2
        %v673 = vadd.f32 %v671, %v672
        %v674 = vrot.slane %v673, 1
        %v675 = vadd.f32 %v673, %v674
        %v676 = vsel %vm560, %v636, 0.0
        %v677 = vrot.slane %v676, 4
        %v678 = vadd.f32 %v676, %v677
        %v679 = vrot.slane %v678, 2
        %v680 = vadd.f32 %v678, %v679
        %v681 = vrot.slane %v680, 1
        %v682 = vadd.f32 %v680, %v681
        %v683 = vsel %vm560, %v638, 0.0
        %v684 = vrot.slane %v683, 4
        %v685 = vadd.f32 %v683, %v684
        %v686 = vrot.slane %v685, 2
        %v687 = vadd.f32 %v685, %v686
        %v688 = vrot.slane %v687, 1
        %v689 = vadd.f32 %v687, %v688
        %v690 = vsel %vm560, %v640, 0.0
        %v691 = vrot.slane %v690, 4
        %v692 = vadd.f32 %v690, %v691
        %v693 = vrot.slane %v692, 2
        %v694 = vadd.f32 %v692, %v693
        %v695 = vrot.slane %v694, 1
        %v696 = vadd.f32 %v694, %v695
        %v697 = vrcp.pop %v647
        %v698 = vmul.f32 %v626, %v697
        %v699 = vrcp.pop %v654
        %v700 = vmul.f32 %v628, %v699
        %v701 = vrcp.pop %v661
        %v702 = vmul.f32 %v630, %v701
        %v703 = vrcp.pop %v668
        %v704 = vmul.f32 %v632, %v703
        %v705 = vrcp.pop %v675
        %v706 = vmul.f32 %v634, %v705
        %v707 = vrcp.pop %v682
        %v708 = vmul.f32 %v636, %v707
        %v709 = vrcp.pop %v689
        %v710 = vmul.f32 %v638, %v709
        %v711 = vrcp.pop %v696
        %v712 = vmul.f32 %v640, %v711
        %713 = vst [vmem:[%s210] sm:$0x7f] %v698
        %714 = vst [vmem:[%s210 + $0x8] sm:$0x7f] %v700
        %715 = vst [vmem:[%s210 + $0x10] sm:$0x7f] %v702
        %716 = vst [vmem:[%s210 + $0x18] sm:$0x7f] %v704
        %717 = vst [vmem:[%s210 + $0x20] sm:$0x7f] %v706
        %718 = vst [vmem:[%s210 + $0x28] sm:$0x7f] %v708
        %719 = vst [vmem:[%s210 + $0x30] sm:$0x7f] %v710
        %720 = vst [vmem:[%s210 + $0x38] sm:$0x7f] %v712
        %v721 = vmul.f32 %v698, %v478
        %v722 = vmul.f32 %v700, %v485
        %v723 = vmul.f32 %v702, %v492
        %v724 = vmul.f32 %v704, %v499
        %v725 = vmul.f32 %v706, %v506
        %v726 = vmul.f32 %v708, %v513
        %v727 = vmul.f32 %v710, %v520
        %v728 = vmul.f32 %v712, %v527
        %v729 = vsel %vm560, %v721, 0.0
        %v730 = vrot.slane %v729, 4
        %v731 = vadd.f32 %v729, %v730
        %v732 = vrot.slane %v731, 2
        %v733 = vadd.f32 %v731, %v732
        %v734 = vrot.slane %v733, 1
        %v735 = vadd.f32 %v733, %v734
        %v736 = vsel %vm560, %v722, 0.0
        %v737 = vrot.slane %v736, 4
        %v738 = vadd.f32 %v736, %v737
        %v739 = vrot.slane %v738, 2
        %v740 = vadd.f32 %v738, %v739
        %v741 = vrot.slane %v740, 1
        %v742 = vadd.f32 %v740, %v741
        %v743 = vsel %vm560, %v723, 0.0
        %v744 = vrot.slane %v743, 4
        %v745 = vadd.f32 %v743, %v744
        %v746 = vrot.slane %v745, 2
        %v747 = vadd.f32 %v745, %v746
        %v748 = vrot.slane %v747, 1
        %v749 = vadd.f32 %v747, %v748
        %v750 = vsel %vm560, %v724, 0.0
        %v751 = vrot.slane %v750, 4
        %v752 = vadd.f32 %v750, %v751
        %v753 = vrot.slane %v752, 2
        %v754 = vadd.f32 %v752, %v753
        %v755 = vrot.slane %v754, 1
        %v756 = vadd.f32 %v754, %v755
        %v757 = vsel %vm560, %v725, 0.0
        %v758 = vrot.slane %v757, 4
        %v759 = vadd.f32 %v757, %v758
        %v760 = vrot.slane %v759, 2
        %v761 = vadd.f32 %v759, %v760
        %v762 = vrot.slane %v761, 1
        %v763 = vadd.f32 %v761, %v762
        %v764 = vsel %vm560, %v726, 0.0
        %v765 = vrot.slane %v764, 4
        %v766 = vadd.f32 %v764, %v765
        %v767 = vrot.slane %v766, 2
        %v768 = vadd.f32 %v766, %v767
        %v769 = vrot.slane %v768, 1
        %v770 = vadd.f32 %v768, %v769
        %v771 = vsel %vm560, %v727, 0.0
        %v772 = vrot.slane %v771, 4
        %v773 = vadd.f32 %v771, %v772
        %v774 = vrot.slane %v773, 2
        %v775 = vadd.f32 %v773, %v774
        %v776 = vrot.slane %v775, 1
        %v777 = vadd.f32 %v775, %v776
        %v778 = vsel %vm560, %v728, 0.0
        %v779 = vrot.slane %v778, 4
        %v780 = vadd.f32 %v778, %v779
        %v781 = vrot.slane %v780, 2
        %v782 = vadd.f32 %v780, %v781
        %v783 = vrot.slane %v782, 1
        %v784 = vadd.f32 %v782, %v783
        %v793 = vcombine.low %v735, %v742
        %v794 = vcombine.low %v749, %v756
        %v795 = vcombine.low %v763, %v770
        %v796 = vcombine.low %v777, %v784
        %v798 = vunpack.c.l.s4 1966171168
        %v799 = vunpack.c.0.s8 %v798
        %v800 = vlaneseq
        %v801 = vshrl.u32 %v800, 7
        %v802 = vsub.s32 %v799, %v801
        %v803 = vrot.slane %v793, %v802
        %v805 = vunpack.c.l.s4 1966171168
        %v806 = vunpack.c.0.s8 %v805
        %v807 = vlaneseq
        %v808 = vshrl.u32 %v807, 7
        %v809 = vsub.s32 %v806, %v808
        %v810 = vrot.slane %v794, %v809
        %v812 = vunpack.c.l.s4 1966171168
        %v813 = vunpack.c.0.s8 %v812
        %v814 = vlaneseq
        %v815 = vshrl.u32 %v814, 7
        %v816 = vsub.s32 %v813, %v815
        %v817 = vrot.slane %v795, %v816
        %v819 = vunpack.c.l.s4 1966171168
        %v820 = vunpack.c.0.s8 %v819
        %v821 = vlaneseq
        %v822 = vshrl.u32 %v821, 7
        %v823 = vsub.s32 %v820, %v822
        %v824 = vrot.slane %v796, %v823
        %v825 = vcombine.low %v803, %v810
        %v826 = vcombine.low %v817, %v824
        %v828 = vunpack.c.l.s4 1966171168
        %v829 = vunpack.c.0.s8 %v828
        %v830 = vlaneseq
        %v831 = vshrl.u32 %v830, 7
        %v832 = vsub.s32 %v829, %v831
        %v833 = vrot.slane %v825, %v832
        %v835 = vunpack.c.l.s4 1966171168
        %v836 = vunpack.c.0.s8 %v835
        %v837 = vlaneseq
        %v838 = vshrl.u32 %v837, 7
        %v839 = vsub.s32 %v836, %v838
        %v840 = vrot.slane %v826, %v839
        %v841 = vcombine.low %v833, %v840
        %843 = vst [vmem:[%s203] sm:$0xff] %v841
        %s844 = sand.u32 %s80, 1
        %s845 = scalar_lea.sflag [#allocation4], %s844
        %s846 = sand.u32 %s80, 1
        %s847 = smul.addr %s846, 8
        %s848 = scalar_lea.vmem [#allocation7], %s847
        %s849 = sand.u32 %s106, 1
        %s850 = scalar_lea.sflag [#allocation9], %s849
        %s851 = sand.u32 %s106, 1
        %s852 = smul.addr %s851, 64
        %s853 = scalar_lea.vmem [#allocation8], %s852
        // Predicated region
        $region37: #{tpu_custom_call.1} parent=27 // pred_check
          %p854 = pneg %p90
        $region38: #{tpu_custom_call.1} parent=27 // pred_check_branch
          %856 = sbr.rel (%p854) target = $region40
        $region39: #{tpu_custom_call.1} parent=27 // pred_region
          %s857 = smul.u32 8, %s25
          %s859 = ssub.s32 128, 128
          %860 = vsyncadd %s845, %s859
          %s861 = smul.addr %s857, 16
          %s862 = scalar_lea.hbm %s2, %s861
          %s864 = sshll.u32 %s848, 4
          %s865 = int_to_ptr.vmem [resolvable:$true] %s864
          %867 = dma.vmem_to_hbm [thread:$0]  %s865, 128, %s862, %s845
        $region40: #{tpu_custom_call.1} parent=27 // pred_fallthru
          _
        // Predicated region
        $region41: #{tpu_custom_call.1} parent=27 // pred_check
          %p868 = pneg %p116
        $region42: #{tpu_custom_call.1} parent=27 // pred_check_branch
          %870 = sbr.rel (%p868) target = $region44
        $region43: #{tpu_custom_call.1} parent=27 // pred_region
          %s871 = smul.u32 8, %s25
          %s873 = ssub.s32 1024, 1024
          %874 = vsyncadd %s850, %s873
          %s875 = smul.addr %s871, 128
          %s876 = scalar_lea.hbm %s3, %s875
          %s878 = sshll.u32 %s853, 4
          %s879 = int_to_ptr.vmem [resolvable:$true] %s878
          %881 = dma.vmem_to_hbm [thread:$0]  %s879, 1024, %s876, %s850
        $region44: #{tpu_custom_call.1} parent=27 // pred_fallthru
          _
      $region28: #{tpu_custom_call.1} parent=5 // pred_fallthru
        _
      %p882 = scmp.le.s32.totalorder 2, %s20
      // Predicated region
      $region45: #{tpu_custom_call.1} parent=5 // pred_check
        %p883 = pneg %p882
      $region46: #{tpu_custom_call.1} parent=5 // pred_check_branch
        %885 = sbr.rel (%p883) target = $region48
      $region47: #{tpu_custom_call.1} parent=5 // pred_region
        %s886 = ssub.s32 %s20, 2
        // Predicated region
        $region49: #{tpu_custom_call.1} parent=47 // pred_check
          %p887 = pneg %p96
        $region50: #{tpu_custom_call.1} parent=47 // pred_check_branch
          %889 = sbr.rel (%p887) target = $region52
        $region51: #{tpu_custom_call.1} parent=47 // pred_region
          %s890 = sand.u32 %s81, 1
          %s891 = scalar_lea.sflag [#allocation4], %s890
          %s892 = sand.u32 %s81, 1
          %s893 = smul.addr %s892, 8
          %s894 = scalar_lea.vmem [#allocation7], %s893
          %895 = dma.done %s891, 128
        $region52: #{tpu_custom_call.1} parent=47 // pred_fallthru
          _
        // Predicated region
        $region53: #{tpu_custom_call.1} parent=47 // pred_check
          %p896 = pneg %p122
        $region54: #{tpu_custom_call.1} parent=47 // pred_check_branch
          %898 = sbr.rel (%p896) target = $region56
        $region55: #{tpu_custom_call.1} parent=47 // pred_region
          %s899 = sand.u32 %s107, 1
          %s900 = scalar_lea.sflag [#allocation9], %s899
          %s901 = sand.u32 %s107, 1
          %s902 = smul.addr %s901, 64
          %s903 = scalar_lea.vmem [#allocation8], %s902
          %904 = dma.done %s900, 1024
        $region56: #{tpu_custom_call.1} parent=47 // pred_fallthru
          _
      $region48: #{tpu_custom_call.1} parent=5 // pred_fallthru
        _
    $region6: #{tpu_custom_call.1} parent=1 // loop_footer
      %s24 = sadd.s32 1, %s20
    $region7: #{tpu_custom_call.1} parent=1 // loop_footer_branch
      %19 = sbr.rel target = $region3
    $region8: #{tpu_custom_call.1} parent=1 // loop_exit
      _
    %905 = vsyncpa [#allocation3], 1
    %s906 = scalar_lea.sflag [#allocation3], 1
    %907 = vsyncpa %s906, 1
    %908 = vsyncpa [#allocation6], 1
    %s909 = scalar_lea.sflag [#allocation6], 1
    %910 = vsyncpa %s909, 1
    %911 = vsyncpa [#allocation4], 1
    %s912 = scalar_lea.sflag [#allocation4], 1
    %913 = vsyncpa %s912, 1
    %914 = vsyncpa [#allocation9], 1
    %s915 = scalar_lea.sflag [#allocation9], 1
    %916 = vsyncpa %s915, 1

</llo_original>
